<compile_context>
chip_gen: v5e
topology: v5e:2x2
jax: 0.10.0
libtpu: 0.0.40
codegen_flags: <defaults>
</compile_context>

<pallas_src>
import functools
import math

import jax
import jax.numpy as jnp
from jax import lax
from jax.experimental import pallas as pl
from jax.experimental.pallas import tpu as pltpu


# --------------------------------------------------------------------------
# Pre-pass kernels: one-shot L2 normalization + cast to the MXU operand dtype
# --------------------------------------------------------------------------

def _normalize_rows_kernel(x_ref, o_ref):
    # Normalize each row of x (feature dim is the lane axis, un-tiled).
    x = x_ref[...].astype(jnp.float32)
    o_ref[...] = (x * lax.rsqrt(jnp.sum(x * x, axis=1, keepdims=True))
                  ).astype(o_ref.dtype)


def _normalize_cols_kernel(w_ref, o_ref):
    # Normalize each column of weight (feature dim is the sublane axis, un-tiled).
    w = w_ref[...].astype(jnp.float32)
    o_ref[...] = (w * lax.rsqrt(jnp.sum(w * w, axis=0, keepdims=True))
                  ).astype(o_ref.dtype)


def _pick_tile(n, candidates):
    for t in candidates:
        if n % t == 0:
            return t
    return n  # full dimension is always a legal block


def normalize_rows(x, out_dtype):
    B, D = x.shape
    tb = _pick_tile(B, (512, 256, 128, 64, 32, 16))
    return pl.pallas_call(
        _normalize_rows_kernel,
        out_shape=jax.ShapeDtypeStruct((B, D), out_dtype),
        grid_spec=pltpu.PrefetchScalarGridSpec(
            num_scalar_prefetch=0,
            grid=(B // tb,),
            in_specs=[pl.BlockSpec((tb, D), lambda i: (i, 0))],
            out_specs=pl.BlockSpec((tb, D), lambda i: (i, 0)),
        ),
        compiler_params=pltpu.CompilerParams(dimension_semantics=("parallel",)),
    )(x)


def normalize_cols(w, out_dtype):
    D, C = w.shape
    tc = _pick_tile(C, (2048, 1024, 512, 256, 128))
    return pl.pallas_call(
        _normalize_cols_kernel,
        out_shape=jax.ShapeDtypeStruct((D, C), out_dtype),
        grid_spec=pltpu.PrefetchScalarGridSpec(
            num_scalar_prefetch=0,
            grid=(C // tc,),
            in_specs=[pl.BlockSpec((D, tc), lambda j: (0, j))],
            out_specs=pl.BlockSpec((D, tc), lambda j: (0, j)),
        ),
        compiler_params=pltpu.CompilerParams(dimension_semantics=("parallel",)),
    )(w)


# --------------------------------------------------------------------------
# Main kernel: cosine matmul + ArcFace margin on the label column
# --------------------------------------------------------------------------

def arcnet_margin_kernel(x_ref, w_ref, label_ref, out_ref, *,
                         margin, scale, easy_margin, block_c):
    # Operands are already L2-normalized (and bf16 by default) -> straight MXU.
    cos = jnp.dot(x_ref[...], w_ref[...],
                  preferred_element_type=jnp.float32)          # (TB, TC) f32

    tb, tc = cos.shape
    c0 = pl.program_id(0) * block_c                            # class-tile offset
    local_label = label_ref[...] - c0                          # (TB, 1) int32
    lane = lax.broadcasted_iota(jnp.int32, (tb, tc), dimension=1)
    is_label = lane == local_label                             # (TB, TC) bool

    # ArcFace margin math on the label column only: (TB, 1) work.
    cos_m = math.cos(margin)
    sin_m = math.sin(margin)
    th = -math.cos(margin)
    mm = math.sin(margin) * margin

    cos_l = jnp.sum(jnp.where(is_label, cos, 0.0), axis=1, keepdims=True)
    # bf16-rounded operands can push |cos| a hair above 1 -> clamp so the
    # sqrt argument stays non-negative (otherwise NaN in phi for that row).
    cos_l = jnp.clip(cos_l, -1.0, 1.0)
    sin_l = jnp.sqrt(1.0 - cos_l * cos_l + 1e-06)
    phi_l = cos_l * cos_m - sin_l * sin_m
    if easy_margin:
        phi_l = jnp.where(cos_l > 0.0, phi_l, cos_l)
    else:
        phi_l = jnp.where(cos_l > th, phi_l, cos_l - mm)
    # If this class tile does not contain the row's label, cos_l/phi_l are
    # never selected (is_label all-False in that row), so this stays exact.

    out_ref[...] = jnp.where(is_label, phi_l * scale, cos * scale
                             ).astype(out_ref.dtype)


def _vmem_budget_bytes():
    """~70% of this generation's physical VMEM (64 MiB fallback)."""
    cap = 64 * 1024 * 1024
    try:
        cap = int(pltpu.get_tpu_info().vmem_capacity_bytes)
    except Exception:
        pass
    return int(cap * 0.7)


def _tile_vmem_bytes(block_b, block_c, D, operand_bytes, out_bytes):
    w_tiles = 2 * D * block_c * operand_bytes        # double-buffered weight
    x_tiles = 2 * block_b * D * operand_bytes        # double-buffered x
    lbl_tiles = 2 * block_b * 4
    out_tiles = 2 * block_b * block_c * out_bytes    # double-buffered output
    temps = 4 * block_b * block_c * 4                # cos / mask / where temporaries
    return w_tiles + x_tiles + lbl_tiles + out_tiles + temps


def arcnet_forward(x, weight, label, *,
                   margin=0.3, scale=30.0, easy_margin=False,
                   block_b=None, block_c=None, bf16_matmul=True,
                   out_dtype=jnp.float32, vmem_limit_bytes=None):
    """x: (B, D) f32, weight: (D, C) f32, label: (B, 1) int32 -> (B, C)."""
    B, D = x.shape
    Dw, C = weight.shape
    assert Dw == D and label.shape == (B, 1)

    operand_dtype = jnp.bfloat16 if bf16_matmul else jnp.float32
    operand_bytes = 2 if bf16_matmul else 4
    out_bytes = jnp.dtype(out_dtype).itemsize

    # One-shot normalization (removes per-grid-step redundant rsqrt/cast and
    # halves operand HBM bytes when bf16).
    x_n = normalize_rows(x, operand_dtype)
    w_n = normalize_cols(weight, operand_dtype)

    # Batch tile: 256 fills the 256-wide MXU M dim on v6e/v7x; smaller on tiny B.
    if block_b is None:
        block_b = _pick_tile(B, (256, 128, 64, 32, 16))

    # Class tile: biggest candidate that both divides C and fits the VMEM budget.
    budget = _vmem_budget_bytes()
    if block_c is None:
        divisors = [c for c in (4096, 2048, 1024, 512, 256, 128) if C % c == 0]
        block_c = C
        if divisors:
            block_c = divisors[-1]  # smallest legal fallback
            for cand in divisors:
                if _tile_vmem_bytes(block_b, cand, D, operand_bytes, out_bytes) <= budget:
                    block_c = cand
                    break
        if vmem_limit_bytes is None:
            vmem_limit_bytes = budget

    assert B % block_b == 0 and C % block_c == 0

    # Class axis OUTER (parallel, megacore shards weight), batch axis INNER
    # (arbitrary): weight index_map is constant along the inner axis, so its
    # DMA is elided across batch steps -> weight streamed from HBM ~once.
    grid = (C // block_c, B // block_b)

    kernel = functools.partial(
        arcnet_margin_kernel,
        margin=margin, scale=scale, easy_margin=easy_margin, block_c=block_c,
    )

    cost = pl.CostEstimate(
        flops=2 * B * D * C,
        transcendentals=B * (C // block_c),  # per-row sqrt in the margin path
        bytes_accessed=(D * C * operand_bytes                       # weight, once
                        + (C // block_c) * B * D * operand_bytes    # x, per class tile
                        + B * C * out_bytes                         # output
                        + B * 4),                                   # labels
    )

    return pl.pallas_call(
        kernel,
        out_shape=jax.ShapeDtypeStruct((B, C), out_dtype),
        grid_spec=pltpu.PrefetchScalarGridSpec(
            num_scalar_prefetch=0,
            grid=grid,
            in_specs=[
                pl.BlockSpec((block_b, D), lambda j, i: (i, 0)),
                # TODO(synk): if xprof shows the weight DMA exposed at outer-step
                # boundaries, add pipeline_mode=pl.Buffered(3) here (gate on the
                # v7x 64 MiB VMEM budget).
                pl.BlockSpec((D, block_c), lambda j, i: (0, j)),
                pl.BlockSpec((block_b, 1), lambda j, i: (i, 0)),
            ],
            out_specs=pl.BlockSpec((block_b, block_c), lambda j, i: (i, j)),
        ),
        compiler_params=pltpu.CompilerParams(
            dimension_semantics=("parallel", "arbitrary"),
            vmem_limit_bytes=vmem_limit_bytes,
        ),
        cost_estimate=cost,
    )(x_n, w_n, label)


# --------------------------------------------------------------------------
# Reference + test harness
# --------------------------------------------------------------------------

def xavier_uniform(key, shape, dtype=jnp.float32):
    fan_in, fan_out = shape
    limit = math.sqrt(6.0 / (fan_in + fan_out))
    return jax.random.uniform(key, shape, dtype=dtype, minval=-limit, maxval=limit)


def arcnet_reference(x, weight, label, *, margin=0.3, scale=30.0,
                     easy_margin=False, bf16_matmul=False):
    """Pure-JAX reference mirroring the PyTorch module."""
    x_n = x / jnp.sqrt(jnp.sum(jnp.square(x), axis=1, keepdims=True))
    w_n = weight / jnp.sqrt(jnp.sum(jnp.square(weight), axis=0, keepdims=True))
    if bf16_matmul:
        cos = jnp.dot(x_n.astype(jnp.bfloat16), w_n.astype(jnp.bfloat16),
                      preferred_element_type=jnp.float32)
    else:
        cos = x_n @ w_n
    sin = jnp.sqrt(1.0 - jnp.square(cos) + 1e-06)
    phi = cos * math.cos(margin) - sin * math.sin(margin)
    th = -math.cos(margin)
    mm = math.sin(margin) * margin
    if easy_margin:
        phi = jnp.where(cos > 0.0, phi, cos)
    else:
        phi = jnp.where(cos > th, phi, cos - mm)
    one_hot = jax.nn.one_hot(label[:, 0], cos.shape[1], dtype=jnp.float32)
    return (one_hot * phi + (1.0 - one_hot) * cos) * scale


if __name__ == "__main__":
    # Small shapes consistent with the module; picked so the explicit-tile run
    # has >1 tile on both grid axes (grid = (2, 2)).
    B = 32
    FEATURE_DIM = 32
    CLASS_DIM = 256

    key = jax.random.PRNGKey(0)
    kx, kw, kl = jax.random.split(key, 3)

    x = jax.random.normal(kx, (B, FEATURE_DIM), dtype=jnp.float32)
    weight = xavier_uniform(kw, (FEATURE_DIM, CLASS_DIM))
    label = jax.random.randint(kl, (B, 1), 0, CLASS_DIM, dtype=jnp.int32)

    ref_bf16 = arcnet_reference(x, weight, label, bf16_matmul=True)
    ref_f32 = arcnet_reference(x, weight, label, bf16_matmul=False)

    # 1) Explicit small tiles -> exercises the tiled (class-outer, batch-inner) path.
    out = arcnet_forward(x, weight, label, block_b=16, block_c=128)
    out = jax.block_until_ready(out)
    assert out.shape == (B, CLASS_DIM)
    assert jnp.all(jnp.isfinite(out)), "non-finite output"
    assert jnp.allclose(out, ref_bf16, atol=5e-2, rtol=1e-3), "mismatch vs bf16 reference"
    assert jnp.allclose(out, ref_f32, atol=2.5e-1, rtol=1e-2), "mismatch vs f32 reference"

    # 2) Default (VMEM-budgeted) tile selection path.
    out2 = jax.block_until_ready(arcnet_forward(x, weight, label))
    assert jnp.allclose(out2, ref_bf16, atol=5e-2, rtol=1e-3), "mismatch (default tiles)"

    print("KERNEL_OK")
</pallas_src>

<mosaic_0001>
module attributes {stable_mosaic.version = 11 : i64} {
  func.func @_normalize_rows_kernel(%arg0: i32, %arg1: memref<32x32xf32, #tpu.memory_space<vmem>>, %arg2: memref<32x32xbf16, #tpu.memory_space<vmem>>) attributes {dimension_semantics = [#tpu.dimension_semantics<parallel>], iteration_bounds = array<i64: 1>, scalar_prefetch = 0 : i64, scratch_operands = 0 : i64, tpu.core_type = #tpu.core_type<tc>, window_params = [{transform_indices = @transform_0, window_bounds = array<i64: 32, 32>}, {transform_indices = @transform_1, window_bounds = array<i64: 32, 32>}]} {
    %c0 = arith.constant 0 : index
    %c0_0 = arith.constant 0 : index
    %0 = vector.load %arg1[%c0, %c0_0] : memref<32x32xf32, #tpu.memory_space<vmem>>, vector<32x32xf32>
    %1 = arith.mulf %0, %0 : vector<32x32xf32>
    %cst = arith.constant dense<0.000000e+00> : vector<32xf32>
    %2 = vector.multi_reduction <add>, %1, %cst [1] : vector<32x32xf32> to vector<32xf32>
    %3 = vector.shape_cast %2 : vector<32xf32> to vector<32x1xf32>
    %4 = math.rsqrt %3 : vector<32x1xf32>
    %5 = vector.broadcast %4 : vector<32x1xf32> to vector<32x32xf32>
    %6 = arith.mulf %0, %5 : vector<32x32xf32>
    %7 = arith.truncf %6 : vector<32x32xf32> to vector<32x32xbf16>
    %c0_1 = arith.constant 0 : index
    %c0_2 = arith.constant 0 : index
    %8 = vector.load %arg2[%c0_1, %c0_2] : memref<32x32xbf16, #tpu.memory_space<vmem>>, vector<32x32xbf16>
    tpu.vector_store %arg2[%c0_1, %c0_2], %7 {strides = array<i32>} : memref<32x32xbf16, #tpu.memory_space<vmem>>, vector<32x32xbf16>,
    return
  }
  func.func @transform_0(%arg0: i32) -> (i32, i32) {
    %c0_i32 = arith.constant 0 : i32
    %c0_i32_0 = arith.constant 0 : i32
    return %arg0, %c0_i32 : i32, i32
  }
  func.func @transform_1(%arg0: i32) -> (i32, i32) {
    %c0_i32 = arith.constant 0 : i32
    %c0_i32_0 = arith.constant 0 : i32
    return %arg0, %c0_i32 : i32, i32
  }
}

</mosaic_0001>

<llo_original>
// kernel: tpu_custom_call.1
$region0: #{tpu_custom_call.1}
  #allocation0 [shape = 'u32[]', space=smem, size = 0x4, offset = 0x4, fixed_abs, tag = 'smem constant byte address 0x4 - core index']
  #allocation1 [shape = 'u32[72,128]{1,0:T(1,128)}', space=vmem, size = 0x9000, scoped, tag = 'internal scratch']
  %s0 = inlined_call_operand.hbm [shape: f32[32,32], index: 0, kind: input, shape index: {}]
  %s1 = inlined_call_operand.hbm [shape: bf16[32,32], index: 1, kind: output, shape index: {}]
  %s2 = sld [smem:[#allocation0]]
  $region18: #{tpu_custom_call.1} parent=0
    _
  %s4 = ssub.s32 1, %s2
  %s5 = scalar_select 0, %s4, %s2
  $region1: #{tpu_custom_call.1} parent=0
    #allocation2 [shape = 'u8[16384]{0}', space=vmem, size = 0x4000, scoped, tag = 'input window, operand 0, single buffered']
    #allocation3 [shape = 's32[1]{0}', space=sflag, size = 0x4, scoped, tag = 'scoped memory for tpu_custom_call.1']
    #allocation4 [shape = 's32[1]{0}', space=sflag, size = 0x4, scoped, tag = 'scoped memory for tpu_custom_call.1']
    #allocation5 [shape = 'u8[8192]{0}', space=vmem, size = 0x2000, scoped, tag = 'output window, operand 0, single buffered']
    %6 = vsyncpa [#allocation3], 0
    %7 = vsyncpa [#allocation4], 0
    // Predicated region
    $region2: #{tpu_custom_call.1} parent=1 // pred_check
      _
    $region3: #{tpu_custom_call.1} parent=1 // pred_check_branch
      %9 = sbr.rel (0) target = $region5
    $region4: #{tpu_custom_call.1} parent=1 // pred_region
      %11 = vsyncadd [#allocation3], 0
      %s12 = sshll.u32 %s0, 4
      %s13 = int_to_ptr.hbm [resolvable:$true] %s12
      %s14 = sshll.u32 [#allocation2], 4
      %s15 = int_to_ptr.vmem [resolvable:$true] %s14
      %20 = dma.hbm_to_vmem [thread:$0]  %s13, 512, %s15, [#allocation3], 128, 128, 8
    $region5: #{tpu_custom_call.1} parent=1 // pred_fallthru
      _
    // Predicated region
    $region6: #{tpu_custom_call.1} parent=1 // pred_check
      _
    $region7: #{tpu_custom_call.1} parent=1 // pred_check_branch
      %22 = sbr.rel (0) target = $region9
    $region8: #{tpu_custom_call.1} parent=1 // pred_region
      %24 = dma.done [#allocation3], 512
    $region9: #{tpu_custom_call.1} parent=1 // pred_fallthru
      _
    %v25 = vld [vmem:[#allocation2] sm:$0xff]
    %v26 = vld [vmem:[#allocation2 + $0x8] sm:$0xff]
    %v27 = vld [vmem:[#allocation2 + $0x10] sm:$0xff]
    %v28 = vld [vmem:[#allocation2 + $0x18] sm:$0xff]
    %v29 = vmul.f32 %v25, %v25
    %v30 = vmul.f32 %v26, %v26
    %v31 = vmul.f32 %v27, %v27
    %v32 = vmul.f32 %v28, %v28
    %vm33 = vcmask 261120
    %v34 = vsel %vm33, %v29, 0.0
    %35 = vadd.xlane.f32.xlu0 %v34
    %v36 = vpop.xlane.xlu0 %35
    %v37 = vsel %vm33, %v30, 0.0
    %38 = vadd.xlane.f32.xlu0 %v37
    %v39 = vpop.xlane.xlu0 %38
    %v40 = vsel %vm33, %v31, 0.0
    %41 = vadd.xlane.f32.xlu0 %v40
    %v42 = vpop.xlane.xlu0 %41
    %v43 = vsel %vm33, %v32, 0.0
    %44 = vadd.xlane.f32.xlu0 %v43
    %v45 = vpop.xlane.xlu0 %44
    %v46 = vrsqrt.pop %v36
    %v47 = vmul.f32 %v46, %v36
    %v48 = vmul.f32 %v47, %v46
    %v49 = vmul.f32 0.5, %v48
    %v50 = vsub.f32 1.5, %v49
    %v51 = vmul.f32 %v46, %v50
    %vm52 = vweird.f32 %v36
    %vm53 = vweird.f32 %v46
    %vm54 = vmor %vm52, %vm53
    %v55 = vsel %vm54, %v46, %v51
    %v56 = vrsqrt.pop %v39
    %v57 = vmul.f32 %v56, %v39
    %v58 = vmul.f32 %v57, %v56
    %v59 = vmul.f32 0.5, %v58
    %v60 = vsub.f32 1.5, %v59
    %v61 = vmul.f32 %v56, %v60
    %vm62 = vweird.f32 %v39
    %vm63 = vweird.f32 %v56
    %vm64 = vmor %vm62, %vm63
    %v65 = vsel %vm64, %v56, %v61
    %v66 = vrsqrt.pop %v42
    %v67 = vmul.f32 %v66, %v42
    %v68 = vmul.f32 %v67, %v66
    %v69 = vmul.f32 0.5, %v68
    %v70 = vsub.f32 1.5, %v69
    %v71 = vmul.f32 %v66, %v70
    %vm72 = vweird.f32 %v42
    %vm73 = vweird.f32 %v66
    %vm74 = vmor %vm72, %vm73
    %v75 = vsel %vm74, %v66, %v71
    %v76 = vrsqrt.pop %v45
    %v77 = vmul.f32 %v76, %v45
    %v78 = vmul.f32 %v77, %v76
    %v79 = vmul.f32 0.5, %v78
    %v80 = vsub.f32 1.5, %v79
    %v81 = vmul.f32 %v76, %v80
    %vm82 = vweird.f32 %v45
    %vm83 = vweird.f32 %v76
    %vm84 = vmor %vm82, %vm83
    %v85 = vsel %vm84, %v76, %v81
    %v86 = vmul.f32 %v25, %v55
    %v87 = vmul.f32 %v26, %v65
    %v88 = vmul.f32 %v27, %v75
    %v89 = vmul.f32 %v28, %v85
    %v90 = vpack.c.bf16 %v86, %v86
    %v91 = vpack.c.bf16 %v87, %v87
    %v92 = vpack.c.bf16 %v88, %v88
    %v93 = vpack.c.bf16 %v89, %v89
    %vm94 = vcmask 257024
    %95 = vst.msk [vmem:[#allocation5] sm:$0xf] %vm94, %v90
    %96 = vst.msk [vmem:[#allocation5 + $0x4] sm:$0xf] %vm94, %v91
    %97 = vst.msk [vmem:[#allocation5 + $0x8] sm:$0xf] %vm94, %v92
    %98 = vst.msk [vmem:[#allocation5 + $0xc] sm:$0xf] %vm94, %v93
    // Predicated region
    $region10: #{tpu_custom_call.1} parent=1 // pred_check
      _
    $region11: #{tpu_custom_call.1} parent=1 // pred_check_branch
      %100 = sbr.rel (0) target = $region13
    $region12: #{tpu_custom_call.1} parent=1 // pred_region
      %102 = vsyncadd [#allocation4], 0
      %s103 = sshll.u32 [#allocation5], 4
      %s104 = int_to_ptr.vmem [resolvable:$true] %s103
      %s105 = sshll.u32 %s1, 4
      %s106 = int_to_ptr.hbm [resolvable:$true] %s105
      %111 = dma.vmem_to_hbm [thread:$0]  %s104, 256, %s106, [#allocation4], 64, 64, 4
    $region13: #{tpu_custom_call.1} parent=1 // pred_fallthru
      _
    // Predicated region
    $region14: #{tpu_custom_call.1} parent=1 // pred_check
      _
    $region15: #{tpu_custom_call.1} parent=1 // pred_check_branch
      %113 = sbr.rel (0) target = $region17
    $region16: #{tpu_custom_call.1} parent=1 // pred_region
      %115 = dma.done [#allocation4], 256
    $region17: #{tpu_custom_call.1} parent=1 // pred_fallthru
      _
    %116 = vsyncpa [#allocation3], 1
    %117 = vsyncpa [#allocation4], 1

</llo_original>
